<compile_context>
chip_gen: v5e
topology: v5e:2x2
jax: 0.10.0
libtpu: 0.0.40
codegen_flags: <defaults>
</compile_context>

<pallas_src>
import functools

import jax
import jax.numpy as jnp
from jax.experimental import pallas as pl
from jax.experimental.pallas import tpu as pltpu


def mlp_kernel(x_ref, w1_ref, b1_ref, w2_ref, b2_ref, o_ref):
    # Layer 1 on the MXU: bf16 operands, f32 accumulation.
    h = jnp.dot(x_ref[...], w1_ref[...], preferred_element_type=jnp.float32)
    h = jnp.maximum(h + b1_ref[...], 0.0)                    # b1 (1,256) broadcasts

    # Layer 2 (256 -> 1): elementwise multiply + lane reduction on the VPU/XLU.
    out = jnp.sum(h * w2_ref[...], axis=-1, keepdims=True)   # (TILE_B, 1)
    out = out + b2_ref[0]                                     # scalar bias from SMEM
    o_ref[...] = out.astype(o_ref.dtype)


def _round_up(n, m):
    return ((n + m - 1) // m) * m


@functools.partial(jax.jit, static_argnames=("tile_b",))
def mlp_forward(x, w1, b1, w2, b2, *, tile_b=512):
    """out = relu(x @ w1 + b1) @ w2 + b2, batch-tiled Pallas TPU kernel."""
    B, K = x.shape
    H = w1.shape[1]

    # Batch tile: multiple of 8 (sublanes), capped at tile_b rows.
    tb = min(tile_b, _round_up(B, 8))
    padded_b = _round_up(B, tb)
    if padded_b != B:
        x = jnp.pad(x, ((0, padded_b - B), (0, 0)))
    grid = (padded_b // tb,)

    # bf16 operands for the layer-1 matmul (native MXU rate, half the bytes);
    # accumulation and everything downstream stays f32.
    x_bf16 = x.astype(jnp.bfloat16)
    w1_bf16 = w1.astype(jnp.bfloat16)
    b1_row = b1.reshape(1, H).astype(jnp.float32)
    w2_row = w2.reshape(1, H).astype(jnp.float32)    # layer-2 weights as a row
    b2_flat = b2.reshape(-1).astype(jnp.float32)     # (1,) scalar -> SMEM

    out = pl.pallas_call(
        mlp_kernel,
        out_shape=jax.ShapeDtypeStruct((padded_b, 1), jnp.float32),
        grid=grid,
        in_specs=[
            pl.BlockSpec((tb, K), lambda i: (i, 0)),             # x: batch-tiled
            pl.BlockSpec((K, H), lambda i: (0, 0)),              # w1: VMEM-resident
            pl.BlockSpec((1, H), lambda i: (0, 0)),              # b1: VMEM-resident
            pl.BlockSpec((1, H), lambda i: (0, 0)),              # w2 row: resident
            pl.BlockSpec(memory_space=pltpu.MemorySpace.SMEM),   # b2 scalar
        ],
        out_specs=pl.BlockSpec((tb, 1), lambda i: (i, 0)),
        compiler_params=pltpu.CompilerParams(
            # Batch tiles are independent -> shard across TensorCores (v7x).
            dimension_semantics=("parallel",),
            vmem_limit_bytes=32 * 1024 * 1024,
        ),
    )(x_bf16, w1_bf16, b1_row, w2_row, b2_flat)

    return out[:B]


def init_params(key):
    # Deterministic init mimicking PyTorch nn.Linear default:
    # U(-1/sqrt(fan_in), 1/sqrt(fan_in)) for both weight and bias.
    k1, k2, k3, k4 = jax.random.split(key, 4)
    in1, out1 = 20, 256
    in2, out2 = 256, 1
    bound1 = 1.0 / jnp.sqrt(in1)
    bound2 = 1.0 / jnp.sqrt(in2)
    w1 = jax.random.uniform(k1, (in1, out1), jnp.float32, -bound1, bound1)
    b1 = jax.random.uniform(k2, (1, out1), jnp.float32, -bound1, bound1)
    w2 = jax.random.uniform(k3, (in2, out2), jnp.float32, -bound2, bound2)
    b2 = jax.random.uniform(k4, (1, out2), jnp.float32, -bound2, bound2)
    return w1, b1, w2, b2


if __name__ == "__main__":
    key = jax.random.PRNGKey(0)
    kx, kp = jax.random.split(key)
    w1, b1, w2, b2 = init_params(kp)

    def reference(xv):
        # Same mixed precision as the kernel: bf16 matmul operands, f32 accum.
        h = jnp.dot(xv.astype(jnp.bfloat16), w1.astype(jnp.bfloat16),
                    preferred_element_type=jnp.float32)
        h = jnp.maximum(h + b1, 0.0)
        return h @ w2 + b2

    # Small batch (single grid step).
    batch = 8
    x = jax.random.normal(kx, (batch, 20), jnp.float32)
    out = mlp_forward(x, w1, b1, w2, b2)
    jax.block_until_ready(out)
    assert out.shape == (batch, 1)
    assert jnp.allclose(out, reference(x), atol=1e-4, rtol=1e-4)

    # Non-multiple batch exercising padding + multi-step grid + "parallel" path.
    batch2 = 600
    x2 = jax.random.normal(jax.random.PRNGKey(1), (batch2, 20), jnp.float32)
    out2 = mlp_forward(x2, w1, b1, w2, b2)
    jax.block_until_ready(out2)
    assert out2.shape == (batch2, 1)
    assert jnp.allclose(out2, reference(x2), atol=1e-4, rtol=1e-4)

    print("KERNEL_OK")
</pallas_src>

<mosaic_0001>
module attributes {stable_mosaic.version = 11 : i64} {
  func.func @mlp_kernel(%arg0: i32, %arg1: memref<8x20xbf16, #tpu.memory_space<vmem>>, %arg2: memref<20x256xbf16, #tpu.memory_space<vmem>>, %arg3: memref<1x256xf32, #tpu.memory_space<vmem>>, %arg4: memref<1x256xf32, #tpu.memory_space<vmem>>, %arg5: memref<1xf32, #tpu.memory_space<smem>>, %arg6: memref<8x1xf32, #tpu.memory_space<vmem>>) attributes {dimension_semantics = [#tpu.dimension_semantics<parallel>], iteration_bounds = array<i64: 1>, scalar_prefetch = 0 : i64, scratch_operands = 0 : i64, tpu.core_type = #tpu.core_type<tc>, window_params = [{transform_indices = @transform_0, window_bounds = array<i64: 8, 20>}, {pipeline_mode = #tpu.pipeline_mode<synchronous>, transform_indices = @transform_1, window_bounds = array<i64: 20, 256>}, {pipeline_mode = #tpu.pipeline_mode<synchronous>, transform_indices = @transform_2, window_bounds = array<i64: 1, 256>}, {pipeline_mode = #tpu.pipeline_mode<synchronous>, transform_indices = @transform_3, window_bounds = array<i64: 1, 256>}, {transform_indices = @transform_4, window_bounds = array<i64: 1>}, {transform_indices = @transform_5, window_bounds = array<i64: 8, 1>}]} {
    %c0 = arith.constant 0 : index
    %c0_0 = arith.constant 0 : index
    %0 = vector.load %arg1[%c0, %c0_0] : memref<8x20xbf16, #tpu.memory_space<vmem>>, vector<8x20xbf16>
    %c0_1 = arith.constant 0 : index
    %c0_2 = arith.constant 0 : index
    %1 = vector.load %arg2[%c0_1, %c0_2] : memref<20x256xbf16, #tpu.memory_space<vmem>>, vector<20x256xbf16>
    %cst = arith.constant dense<0.000000e+00> : vector<8x256xf32>
    %2 = tpu.matmul %0, %1, %cst {dimension_numbers = #tpu.dot_dimension_numbers<[1], [0], [0], [1], [0, 0, 1, 1], [], []>} : vector<8x20xbf16>, vector<20x256xbf16>, vector<8x256xf32> -> vector<8x256xf32>
    %c0_3 = arith.constant 0 : index
    %c0_4 = arith.constant 0 : index
    %3 = vector.load %arg3[%c0_3, %c0_4] : memref<1x256xf32, #tpu.memory_space<vmem>>, vector<1x256xf32>
    %4 = vector.broadcast %3 : vector<1x256xf32> to vector<8x256xf32>
    %5 = arith.addf %2, %4 : vector<8x256xf32>
    %cst_5 = arith.constant 0.000000e+00 : f32
    %6 = vector.broadcast %cst_5 : f32 to vector<8x256xf32>
    %7 = arith.maximumf %5, %6 : vector<8x256xf32>
    %c0_6 = arith.constant 0 : index
    %c0_7 = arith.constant 0 : index
    %8 = vector.load %arg4[%c0_6, %c0_7] : memref<1x256xf32, #tpu.memory_space<vmem>>, vector<1x256xf32>
    %9 = vector.broadcast %8 : vector<1x256xf32> to vector<8x256xf32>
    %10 = arith.mulf %7, %9 : vector<8x256xf32>
    %cst_8 = arith.constant dense<0.000000e+00> : vector<8xf32>
    %11 = vector.multi_reduction <add>, %10, %cst_8 [1] : vector<8x256xf32> to vector<8xf32>
    %12 = vector.shape_cast %11 : vector<8xf32> to vector<8x1xf32>
    %c0_9 = arith.constant 0 : index
    %13 = memref.load %arg5[%c0_9] : memref<1xf32, #tpu.memory_space<smem>>
    %14 = vector.broadcast %13 : f32 to vector<8x1xf32>
    %15 = arith.addf %12, %14 : vector<8x1xf32>
    %c0_10 = arith.constant 0 : index
    %c0_11 = arith.constant 0 : index
    %16 = vector.load %arg6[%c0_10, %c0_11] : memref<8x1xf32, #tpu.memory_space<vmem>>, vector<8x1xf32>
    tpu.vector_store %arg6[%c0_10, %c0_11], %15 {strides = array<i32>} : memref<8x1xf32, #tpu.memory_space<vmem>>, vector<8x1xf32>,
    return
  }
  func.func @transform_0(%arg0: i32) -> (i32, i32) {
    %c0_i32 = arith.constant 0 : i32
    %c0_i32_0 = arith.constant 0 : i32
    return %arg0, %c0_i32 : i32, i32
  }
  func.func @transform_1(%arg0: i32) -> (i32, i32) {
    %c0_i32 = arith.constant 0 : i32
    %c0_i32_0 = arith.constant 0 : i32
    %c0_i32_1 = arith.constant 0 : i32
    return %c0_i32, %c0_i32_0 : i32, i32
  }
  func.func @transform_2(%arg0: i32) -> (i32, i32) {
    %c0_i32 = arith.constant 0 : i32
    %c0_i32_0 = arith.constant 0 : i32
    %c0_i32_1 = arith.constant 0 : i32
    return %c0_i32, %c0_i32_0 : i32, i32
  }
  func.func @transform_3(%arg0: i32) -> (i32, i32) {
    %c0_i32 = arith.constant 0 : i32
    %c0_i32_0 = arith.constant 0 : i32
    %c0_i32_1 = arith.constant 0 : i32
    return %c0_i32, %c0_i32_0 : i32, i32
  }
  func.func @transform_4(%arg0: i32) -> i32 {
    %c0_i32 = arith.constant 0 : i32
    %c0_i32_0 = arith.constant 0 : i32
    return %c0_i32 : i32
  }
  func.func @transform_5(%arg0: i32) -> (i32, i32) {
    %c0_i32 = arith.constant 0 : i32
    %c0_i32_0 = arith.constant 0 : i32
    return %arg0, %c0_i32 : i32, i32
  }
}

</mosaic_0001>

<llo_original>
// kernel: mlp_forward.1
$region0: #{mlp_forward.1}
  #allocation0 [shape = 'u32[]', space=smem, size = 0x4, offset = 0x4, fixed_abs, tag = 'smem constant byte address 0x4 - core index']
  #allocation1 [shape = 'u32[72,128]{1,0:T(1,128)}', space=vmem, size = 0x9000, scoped, tag = 'internal scratch']
  #allocation2 [shape = 'f32[1]{0:T(128)S(6)}', space=smem, size = 0x200, scoped, tag = 'scoped memory for mlp_forward.1']
  %s0 = inlined_call_operand.vmem [shape: bf16[8,20], index: 0, kind: input, shape index: {}]
  %s1 = inlined_call_operand.vmem [shape: bf16[20,256], index: 1, kind: input, shape index: {}]
  %s2 = inlined_call_operand.vmem [shape: f32[1,256], index: 2, kind: input, shape index: {}]
  %s3 = inlined_call_operand.vmem [shape: f32[1,256], index: 3, kind: input, shape index: {}]
  %s4 = inlined_call_operand.<no memory space> [shape: f32[1], index: 4, kind: input, shape index: {}]
  %s5 = inlined_call_operand.vmem [shape: f32[8,1], index: 5, kind: output, shape index: {}]
  %s6 = sld [smem:[#allocation0]]
  $region30: #{mlp_forward.1} parent=0
    _
  %s8 = ssub.s32 1, %s6
  %s9 = scalar_select 0, %s8, %s6
  %10 = sst [smem:[#allocation2]] %s4
  // Predicated region
  $region2: #{mlp_forward.1} parent=0 // pred_check
    _
  $region3: #{mlp_forward.1} parent=0 // pred_check_branch
    %12 = sbr.rel (0) target = $region5
  $region4: #{mlp_forward.1} parent=0 // pred_region
    _
  $region5: #{mlp_forward.1} parent=0 // pred_fallthru
    _
  // Predicated region
  $region6: #{mlp_forward.1} parent=0 // pred_check
    _
  $region7: #{mlp_forward.1} parent=0 // pred_check_branch
    %14 = sbr.rel (0) target = $region9
  $region8: #{mlp_forward.1} parent=0 // pred_region
    _
  $region9: #{mlp_forward.1} parent=0 // pred_fallthru
    _
  // Predicated region
  $region10: #{mlp_forward.1} parent=0 // pred_check
    _
  $region11: #{mlp_forward.1} parent=0 // pred_check_branch
    %16 = sbr.rel (0) target = $region13
  $region12: #{mlp_forward.1} parent=0 // pred_region
    _
  $region13: #{mlp_forward.1} parent=0 // pred_fallthru
    _
  // Predicated region
  $region14: #{mlp_forward.1} parent=0 // pred_check
    _
  $region15: #{mlp_forward.1} parent=0 // pred_check_branch
    %18 = sbr.rel (0) target = $region17
  $region16: #{mlp_forward.1} parent=0 // pred_region
    _
  $region17: #{mlp_forward.1} parent=0 // pred_fallthru
    _
  // Predicated region
  $region18: #{mlp_forward.1} parent=0 // pred_check
    _
  $region19: #{mlp_forward.1} parent=0 // pred_check_branch
    %20 = sbr.rel (0) target = $region21
  $region20: #{mlp_forward.1} parent=0 // pred_region
    _
  $region21: #{mlp_forward.1} parent=0 // pred_fallthru
    _
  %v22 = vld [vmem:[%s0] sm:$0xf]
  %v23 = vld [vmem:[%s1] sm:$0xff]
  %v24 = vld [vmem:[%s1 + $0x8] sm:$0xff]
  %v25 = vld [vmem:[%s1 + $0x10] sm:$0x33]
  %v26 = vld [vmem:[%s2] sm:$0x3]
  %v28 = vperm.slane %v26, 0
  %v29 = vperm.slane %v26, 1
  %v35 = vunpack.c.l.b16 %v23
  %v36 = vunpack.c.h.b16 %v23
  %v37 = vunpack.c.l.b16 %v24
  %v38 = vunpack.c.h.b16 %v24
  %v39 = vunpack.c.l.b16 %v25
  %v40 = vunpack.c.h.b16 %v25
  %v41 = vpack.c.b16 %v37, %v35
  %v42 = vpack.c.b16 %v38, %v36
  %v43 = vpack.c.b16 %v39, %v39
  %v44 = vpack.c.b16 %v40, %v40
  %vm47 = vcmask 162816
  %v49 = vsel %vm47, %v22, 0
  %vm51 = vcmask 1041408
  %v53 = vsel %vm51, %v43, 0
  %v56 = vsel %vm51, %v44, 0
  %58 = vmatpush.bf16.msra.mxu0 0
  %59 = vmatpush.bf16.msra.mxu0 0
  %60 = vmatpush.bf16.msra.mxu0 0
  %61 = vmatpush.bf16.msra.mxu0 0
  %62 = vmatpush.bf16.msra.mxu0 0
  %63 = vmatpush.bf16.msra.mxu0 0
  %64 = vmatpush.bf16.msra.mxu0 %v53
  %65 = vmatpush.bf16.msra.mxu0 %v41
  %66 = vmatmul.bf16.gmra.mxu0 %v49
  %v67 = vpop.f32.mrf.mxu0
  %v68 = vadd.f32 %v28, %v67
  %v69 = vpop.f32.mrf.mxu0
  %70 = vdwg.mxu0
  %71 = vmatpush.bf16.msra.mxu0 0
  %72 = vmatpush.bf16.msra.mxu0 0
  %73 = vmatpush.bf16.msra.mxu0 0
  %74 = vmatpush.bf16.msra.mxu0 0
  %75 = vmatpush.bf16.msra.mxu0 0
  %76 = vmatpush.bf16.msra.mxu0 0
  %77 = vmatpush.bf16.msra.mxu0 %v56
  %78 = vmatpush.bf16.msra.mxu0 %v42
  %79 = vmatmul.bf16.gmra.mxu0 %v49
  %v80 = vpop.f32.mrf.mxu0
  %v81 = vadd.f32 %v29, %v80
  %v82 = vpop.f32.mrf.mxu0
  %83 = vdwg.mxu0
  %v84 = vmax.f32 %v68, 0.0
  %v85 = vmax.f32 %v81, 0.0
  %v86 = vld [vmem:[%s3] sm:$0x3]
  %v88 = vperm.slane %v86, 0
  %v89 = vperm.slane %v86, 1
  %v92 = vmul.f32 %v84, %v88
  %v93 = vmul.f32 %v85, %v89
  %v94 = vadd.f32 %v92, %v93
  %95 = vadd.xlane.f32.xlu0 %v94
  %v96 = vpop.xlane.xlu0 %95
  %s97 = sld [smem:[#allocation2]]
  %v98 = vstv %s97
  %v99 = vadd.f32 %v96, %v98
  %vm100 = vcmask 7168
  %101 = vst.msk [vmem:[%s5] sm:$0xff] %vm100, %v99
  // Predicated region
  $region22: #{mlp_forward.1} parent=0 // pred_check
    _
  $region23: #{mlp_forward.1} parent=0 // pred_check_branch
    %103 = sbr.rel (0) target = $region25
  $region24: #{mlp_forward.1} parent=0 // pred_region
    _
  $region25: #{mlp_forward.1} parent=0 // pred_fallthru
    _
  // Predicated region
  $region26: #{mlp_forward.1} parent=0 // pred_check
    _
  $region27: #{mlp_forward.1} parent=0 // pred_check_branch
    %105 = sbr.rel (0) target = $region29
  $region28: #{mlp_forward.1} parent=0 // pred_region
    _
  $region29: #{mlp_forward.1} parent=0 // pred_fallthru
    _

</llo_original>
